<compile_context>
chip_gen: v5e
topology: v5e:2x2
jax: 0.10.0
libtpu: 0.0.40
codegen_flags: <defaults>
</compile_context>

<pallas_src>
import jax
import jax.numpy as jnp
from jax.experimental import pallas as pl
from jax.experimental.pallas import tpu as pltpu


def _round_up(x, m):
    return ((x + m - 1) // m) * m


def _largest_divisor_tile(dim, max_tile, unit):
    """Largest multiple of `unit` that divides `dim` and is <= max_tile (fallback: dim)."""
    if dim <= max_tile:
        return dim
    t = (max_tile // unit) * unit
    while t >= unit:
        if dim % t == 0:
            return t
        t -= unit
    return dim


def _vmem_capacity_bytes():
    try:
        info = pltpu.get_tpu_info()
        cap = int(getattr(info, "vmem_capacity_bytes", 0))
        if cap > 0:
            return cap
    except Exception:
        pass
    return 64 * 1024 * 1024  # conservative default (v7x per-TensorCore VMEM)


def _prior_mean_kernel(z_ref, mt_ref, bias_ref, out_ref, acc_ref):
    # z_ref:    (TN, TK)  batch x latent tile
    # mt_ref:   (TK, TC)  mean, pre-transposed (MXU-native RHS layout)
    # bias_ref: (1,  TC)  0.5*||mean[c]||^2 (f32)
    # out_ref:  (TN, TC)  lane-dense output tile
    # acc_ref:  (TN, TC)  f32 accumulator scratch (persists across the K axis)
    k = pl.program_id(2)

    @pl.when(k == 0)
    def _init():
        acc_ref[...] = jnp.zeros_like(acc_ref)

    z = z_ref[...]
    mt = mt_ref[...]
    zm = z if z.dtype == mt.dtype else z.astype(mt.dtype)

    # MXU: partial <z, mean> for this K slab, f32 accumulation.
    val = jax.lax.dot_general(
        zm, mt,
        dimension_numbers=(((1,), (0,)), ((), ())),
        preferred_element_type=jnp.float32,
    )
    # VPU/XLU: partial 0.5*||z||^2 for this K slab, in f32.
    zf = z.astype(jnp.float32)
    z_norm = 0.5 * jnp.sum(zf * zf, axis=1, keepdims=True)
    acc_ref[...] += val - z_norm

    @pl.when(k == pl.num_programs(2) - 1)
    def _finalize():
        out_ref[...] = (acc_ref[...] - bias_ref[...]).astype(out_ref.dtype)


def prepare_prior_mean(mean, *, matmul_dtype=None):
    """One-time (per parameter-update) layout prep — NOT on the per-call hot path.

    Returns:
      mean_t: (K, C_pad) mean transposed to MXU-native RHS layout, classes zero-
              padded to a lane-dense multiple of 128 (optionally cast to
              matmul_dtype, e.g. jnp.bfloat16 for v6e/v7x MXUs).
      bias:   (1, C_pad) f32, 0.5*||mean[c]||^2.
    """
    C, K = mean.shape
    C_pad = _round_up(max(C, 1), 128)
    mf = mean.astype(jnp.float32)
    bias = jnp.zeros((1, C_pad), jnp.float32).at[:, :C].set(
        0.5 * jnp.sum(mf * mf, axis=1)[None, :])
    mt_dtype = mean.dtype if matmul_dtype is None else matmul_dtype
    mean_t = jnp.zeros((K, C_pad), mt_dtype).at[:, :C].set(mean.T.astype(mt_dtype))
    return mean_t, bias


def prior_mean_forward(z, mean_t, bias, *, num_classes=None, tile_n=1024,
                       out_dtype=jnp.float32):
    """z: (N, K), mean_t: (K, C_pad), bias: (1, C_pad) -> logits (N, num_classes)."""
    N, K = z.shape
    K2, C_pad = mean_t.shape
    assert K == K2, "latent dims must match"
    assert C_pad % 128 == 0 and bias.shape == (1, C_pad)
    C = C_pad if num_classes is None else num_classes

    z_sz = jnp.dtype(z.dtype).itemsize
    m_sz = jnp.dtype(mean_t.dtype).itemsize
    o_sz = jnp.dtype(out_dtype).itemsize

    # ---- VMEM-aware tile plan ------------------------------------------------
    cap = _vmem_capacity_bytes()
    usable = (cap * 5) // 8  # leave headroom for compiler scratch / semaphores

    # Class tile: lane-dense multiple of 128, <= 1024 (second parallel axis; also
    # shrinks the per-core resident mean block on v7x's 64 MiB VMEM).
    tc = _largest_divisor_tile(C_pad, 1024, 128)
    # K tile: keep all of K resident unless the (K, tc) mean block gets too big.
    if K * tc * m_sz <= usable // 4:
        kt = K
    else:
        kt_max = max(128, (usable // 4) // max(tc * m_sz, 1))
        kt = _largest_divisor_tile(K, kt_max, 128)

    c_tiles = C_pad // tc
    k_tiles = K // kt
    mean_resident = (c_tiles == 1 and k_tiles == 1)
    bias_resident = (c_tiles == 1)

    # Batch tile: as big as fits (target tile_n, multiple of 256); small N uses a
    # single full-extent block so no padding copy is ever needed.
    mean_bufs = 1 if mean_resident else 2
    bias_bufs = 1 if bias_resident else 2
    fixed = mean_bufs * kt * tc * m_sz + bias_bufs * tc * 4
    per_row = 2 * kt * z_sz + 2 * tc * o_sz + tc * 4   # z, out (double-buffered), acc
    tn_cap = max((usable - fixed) // per_row, 256)
    tn = max(min(tile_n, (tn_cap // 256) * 256), 256)
    if N <= tn:
        tn = N
    n_tiles = pl.cdiv(N, tn)

    grid = (n_tiles, c_tiles, k_tiles)

    needed = (mean_bufs * kt * tc * m_sz + bias_bufs * tc * 4
              + 2 * tn * kt * z_sz + 2 * tn * tc * o_sz + tn * tc * 4)
    vmem_limit = int(min(max(needed + (4 << 20), 16 << 20), usable))

    cost = pl.CostEstimate(
        flops=2 * N * C_pad * K,
        transcendentals=0,
        bytes_accessed=N * K * z_sz + K * C_pad * m_sz + C_pad * 4 + N * C_pad * o_sz,
    )

    def _call(allow_single_buffer):
        def spec(shape, index_map, resident):
            if allow_single_buffer and resident:
                try:
                    return pl.BlockSpec(shape, index_map, pipeline_mode=pl.Buffered(1))
                except Exception:
                    return pl.BlockSpec(shape, index_map)
            return pl.BlockSpec(shape, index_map)

        return pl.pallas_call(
            _prior_mean_kernel,
            out_shape=jax.ShapeDtypeStruct((N, C_pad), out_dtype),
            grid_spec=pltpu.PrefetchScalarGridSpec(
                num_scalar_prefetch=0,
                grid=grid,
                in_specs=[
                    spec((tn, kt), lambda i, j, k: (i, k), False),        # z streams
                    spec((kt, tc), lambda i, j, k: (k, j), mean_resident),
                    spec((1, tc), lambda i, j, k: (0, j), bias_resident),
                ],
                out_specs=pl.BlockSpec((tn, tc), lambda i, j, k: (i, j)),
                scratch_shapes=[pltpu.VMEM((tn, tc), jnp.float32)],
            ),
            compiler_params=pltpu.CompilerParams(
                dimension_semantics=("parallel", "parallel", "arbitrary"),
                vmem_limit_bytes=vmem_limit,
            ),
            cost_estimate=cost,
        )(z, mean_t, bias)

    try:
        out_pad = _call(True)
    except Exception:
        # Retry without single-buffered resident operands (older Pallas versions).
        out_pad = _call(False)

    return out_pad[:, :C]


def prior_mean_apply(z, mean, *, matmul_dtype=None, tile_n=1024,
                     out_dtype=jnp.float32):
    """Convenience: prepare + forward. Prefer caching prepare_prior_mean's output."""
    mean_t, bias = prepare_prior_mean(mean, matmul_dtype=matmul_dtype)
    return prior_mean_forward(z, mean_t, bias, num_classes=mean.shape[0],
                              tile_n=tile_n, out_dtype=out_dtype)


def prior_mean_reference(z, mean):
    zf = z.astype(jnp.float32)
    mf = mean.astype(jnp.float32)
    val = zf @ mf.T
    z_norm = 0.5 * jnp.sum(zf * zf, axis=1, keepdims=True)
    bias = 0.5 * jnp.sum(mf * mf, axis=1, keepdims=True).T
    return val - bias - z_norm


if __name__ == "__main__":
    # Small shapes consistent with the module: num_classes=8, latent_space=128, batch=4.
    N, C, K = 4, 8, 128

    key = jax.random.PRNGKey(0)
    k_z, k_m = jax.random.split(key)
    z = jax.random.normal(k_z, (N, K), dtype=jnp.float32)
    # Deterministic parameter init (module __init__ only declares the (C, K) shape).
    mean = jax.random.normal(k_m, (C, K), dtype=jnp.float32) * 0.05

    out = prior_mean_apply(z, mean)
    out = jax.block_until_ready(out)

    ref = prior_mean_reference(z, mean)
    assert out.shape == (N, C)
    # Tolerance covers MXU default-precision matmul vs XLA reference (both f32-accumulated).
    assert jnp.allclose(out, ref, atol=1e-2, rtol=1e-3), "mismatch vs reference"

    # TODO(synk): compute_dist / debug-print branches of the module are host-side
    # helpers, not part of the hot forward path, and are intentionally not kernelized.
    print("KERNEL_OK")
</pallas_src>

<mosaic_0001>
module attributes {stable_mosaic.version = 11 : i64} {
  func.func @_prior_mean_kernel(%arg0: i32, %arg1: i32, %arg2: i32, %arg3: memref<4x128xf32, #tpu.memory_space<vmem>>, %arg4: memref<128x128xf32, #tpu.memory_space<vmem>>, %arg5: memref<1x128xf32, #tpu.memory_space<vmem>>, %arg6: memref<4x128xf32, #tpu.memory_space<vmem>>, %arg7: memref<4x128xf32, #tpu.memory_space<vmem>>) attributes {dimension_semantics = [#tpu.dimension_semantics<parallel>, #tpu.dimension_semantics<parallel>, #tpu.dimension_semantics<arbitrary>], iteration_bounds = array<i64: 1, 1, 1>, scalar_prefetch = 0 : i64, scratch_operands = 1 : i64, tpu.core_type = #tpu.core_type<tc>, window_params = [{transform_indices = @transform_0, window_bounds = array<i64: 4, 128>}, {pipeline_mode = #tpu.pipeline_mode<synchronous>, transform_indices = @transform_1, window_bounds = array<i64: 128, 128>}, {pipeline_mode = #tpu.pipeline_mode<synchronous>, transform_indices = @transform_2, window_bounds = array<i64: 1, 128>}, {transform_indices = @transform_3, window_bounds = array<i64: 4, 128>}]} {
    %c0_i32 = arith.constant 0 : i32
    %0 = arith.cmpi eq, %arg2, %c0_i32 : i32
    %1 = arith.extui %0 : i1 to i32
    %c0_i32_0 = arith.constant 0 : i32
    %2 = arith.cmpi ne, %1, %c0_i32_0 : i32
    scf.if %2 {
      %cst_12 = arith.constant 0.000000e+00 : f32
      %19 = vector.broadcast %cst_12 : f32 to vector<4x128xf32>
      %c0_13 = arith.constant 0 : index
      %c0_14 = arith.constant 0 : index
      %20 = vector.load %arg7[%c0_13, %c0_14] : memref<4x128xf32, #tpu.memory_space<vmem>>, vector<4x128xf32>
      tpu.vector_store %arg7[%c0_13, %c0_14], %19 {strides = array<i32>} : memref<4x128xf32, #tpu.memory_space<vmem>>, vector<4x128xf32>,
    } else {
    }
    %c0 = arith.constant 0 : index
    %c0_1 = arith.constant 0 : index
    %3 = vector.load %arg3[%c0, %c0_1] : memref<4x128xf32, #tpu.memory_space<vmem>>, vector<4x128xf32>
    %c0_2 = arith.constant 0 : index
    %c0_3 = arith.constant 0 : index
    %4 = vector.load %arg4[%c0_2, %c0_3] : memref<128x128xf32, #tpu.memory_space<vmem>>, vector<128x128xf32>
    %cst = arith.constant dense<0.000000e+00> : vector<4x128xf32>
    %5 = tpu.matmul %3, %4, %cst {dimension_numbers = #tpu.dot_dimension_numbers<[1], [0], [0], [1], [0, 0, 1, 1], [], []>} : vector<4x128xf32>, vector<128x128xf32>, vector<4x128xf32> -> vector<4x128xf32>
    %6 = arith.mulf %3, %3 : vector<4x128xf32>
    %cst_4 = arith.constant dense<0.000000e+00> : vector<4xf32>
    %7 = vector.multi_reduction <add>, %6, %cst_4 [1] : vector<4x128xf32> to vector<4xf32>
    %8 = vector.shape_cast %7 : vector<4xf32> to vector<4x1xf32>
    %cst_5 = arith.constant 5.000000e-01 : f32
    %9 = vector.broadcast %cst_5 : f32 to vector<4x1xf32>
    %10 = arith.mulf %9, %8 : vector<4x1xf32>
    %c0_6 = arith.constant 0 : index
    %c0_7 = arith.constant 0 : index
    %11 = vector.load %arg7[%c0_6, %c0_7] : memref<4x128xf32, #tpu.memory_space<vmem>>, vector<4x128xf32>
    %12 = vector.broadcast %10 : vector<4x1xf32> to vector<4x128xf32>
    %13 = arith.subf %5, %12 : vector<4x128xf32>
    %14 = arith.addf %11, %13 : vector<4x128xf32>
    %c0_8 = arith.constant 0 : index
    %c0_9 = arith.constant 0 : index
    %15 = vector.load %arg7[%c0_8, %c0_9] : memref<4x128xf32, #tpu.memory_space<vmem>>, vector<4x128xf32>
    tpu.vector_store %arg7[%c0_8, %c0_9], %14 {strides = array<i32>} : memref<4x128xf32, #tpu.memory_space<vmem>>, vector<4x128xf32>,
    %c0_i32_10 = arith.constant 0 : i32
    %16 = arith.cmpi eq, %arg2, %c0_i32_10 : i32
    %17 = arith.extui %16 : i1 to i32
    %c0_i32_11 = arith.constant 0 : i32
    %18 = arith.cmpi ne, %17, %c0_i32_11 : i32
    scf.if %18 {
      %c0_12 = arith.constant 0 : index
      %c0_13 = arith.constant 0 : index
      %19 = vector.load %arg7[%c0_12, %c0_13] : memref<4x128xf32, #tpu.memory_space<vmem>>, vector<4x128xf32>
      %c0_14 = arith.constant 0 : index
      %c0_15 = arith.constant 0 : index
      %20 = vector.load %arg5[%c0_14, %c0_15] : memref<1x128xf32, #tpu.memory_space<vmem>>, vector<1x128xf32>
      %21 = vector.broadcast %20 : vector<1x128xf32> to vector<4x128xf32>
      %22 = arith.subf %19, %21 : vector<4x128xf32>
      %c0_16 = arith.constant 0 : index
      %c0_17 = arith.constant 0 : index
      %23 = vector.load %arg6[%c0_16, %c0_17] : memref<4x128xf32, #tpu.memory_space<vmem>>, vector<4x128xf32>
      tpu.vector_store %arg6[%c0_16, %c0_17], %22 {strides = array<i32>} : memref<4x128xf32, #tpu.memory_space<vmem>>, vector<4x128xf32>,
    } else {
    }
    return
  }
  func.func @transform_0(%arg0: i32, %arg1: i32, %arg2: i32) -> (i32, i32) {
    %c0_i32 = arith.constant 0 : i32
    return %arg0, %arg2 : i32, i32
  }
  func.func @transform_1(%arg0: i32, %arg1: i32, %arg2: i32) -> (i32, i32) {
    %c0_i32 = arith.constant 0 : i32
    return %arg2, %arg1 : i32, i32
  }
  func.func @transform_2(%arg0: i32, %arg1: i32, %arg2: i32) -> (i32, i32) {
    %c0_i32 = arith.constant 0 : i32
    %c0_i32_0 = arith.constant 0 : i32
    return %c0_i32, %arg1 : i32, i32
  }
  func.func @transform_3(%arg0: i32, %arg1: i32, %arg2: i32) -> (i32, i32) {
    %c0_i32 = arith.constant 0 : i32
    return %arg0, %arg1 : i32, i32
  }
}

module attributes {stable_mosaic.version = 11 : i64} {
  func.func @_prior_mean_kernel(%arg0: i32, %arg1: i32, %arg2: i32, %arg3: memref<4x128xf32, #tpu.memory_space<vmem>>, %arg4: memref<128x128xf32, #tpu.memory_space<vmem>>, %arg5: memref<1x128xf32, #tpu.memory_space<vmem>>, %arg6: memref<4x128xf32, #tpu.memory_space<vmem>>, %arg7: memref<4x128xf32, #tpu.memory_space<vmem>>) attributes {dimension_semantics = [#tpu.dimension_semantics<parallel>, #tpu.dimension_semantics<parallel>, #tpu.dimension_semantics<arbitrary>], iteration_bounds = array<i64: 1, 1, 1>, scalar_prefetch = 0 : i64, scratch_operands = 1 : i64, tpu.core_type = #tpu.core_type<tc>, window_params = [{transform_indices = @transform_0, window_bounds = array<i64: 4, 128>}, {transform_indices = @transform_1, window_bounds = array<i64: 128, 128>}, {transform_indices = @transform_2, window_bounds = array<i64: 1, 128>}, {transform_indices = @transform_3, window_bounds = array<i64: 4, 128>}]} {
    %c0_i32 = arith.constant 0 : i32
    %0 = arith.cmpi eq, %arg2, %c0_i32 : i32
    %1 = arith.extui %0 : i1 to i32
    %c0_i32_0 = arith.constant 0 : i32
    %2 = arith.cmpi ne, %1, %c0_i32_0 : i32
    scf.if %2 {
      %cst_12 = arith.constant 0.000000e+00 : f32
      %19 = vector.broadcast %cst_12 : f32 to vector<4x128xf32>
      %c0_13 = arith.constant 0 : index
      %c0_14 = arith.constant 0 : index
      %20 = vector.load %arg7[%c0_13, %c0_14] : memref<4x128xf32, #tpu.memory_space<vmem>>, vector<4x128xf32>
      tpu.vector_store %arg7[%c0_13, %c0_14], %19 {strides = array<i32>} : memref<4x128xf32, #tpu.memory_space<vmem>>, vector<4x128xf32>,
    } else {
    }
    %c0 = arith.constant 0 : index
    %c0_1 = arith.constant 0 : index
    %3 = vector.load %arg3[%c0, %c0_1] : memref<4x128xf32, #tpu.memory_space<vmem>>, vector<4x128xf32>
    %c0_2 = arith.constant 0 : index
    %c0_3 = arith.constant 0 : index
    %4 = vector.load %arg4[%c0_2, %c0_3] : memref<128x128xf32, #tpu.memory_space<vmem>>, vector<128x128xf32>
    %cst = arith.constant dense<0.000000e+00> : vector<4x128xf32>
    %5 = tpu.matmul %3, %4, %cst {dimension_numbers = #tpu.dot_dimension_numbers<[1], [0], [0], [1], [0, 0, 1, 1], [], []>} : vector<4x128xf32>, vector<128x128xf32>, vector<4x128xf32> -> vector<4x128xf32>
    %6 = arith.mulf %3, %3 : vector<4x128xf32>
    %cst_4 = arith.constant dense<0.000000e+00> : vector<4xf32>
    %7 = vector.multi_reduction <add>, %6, %cst_4 [1] : vector<4x128xf32> to vector<4xf32>
    %8 = vector.shape_cast %7 : vector<4xf32> to vector<4x1xf32>
    %cst_5 = arith.constant 5.000000e-01 : f32
    %9 = vector.broadcast %cst_5 : f32 to vector<4x1xf32>
    %10 = arith.mulf %9, %8 : vector<4x1xf32>
    %c0_6 = arith.constant 0 : index
    %c0_7 = arith.constant 0 : index
    %11 = vector.load %arg7[%c0_6, %c0_7] : memref<4x128xf32, #tpu.memory_space<vmem>>, vector<4x128xf32>
    %12 = vector.broadcast %10 : vector<4x1xf32> to vector<4x128xf32>
    %13 = arith.subf %5, %12 : vector<4x128xf32>
    %14 = arith.addf %11, %13 : vector<4x128xf32>
    %c0_8 = arith.constant 0 : index
    %c0_9 = arith.constant 0 : index
    %15 = vector.load %arg7[%c0_8, %c0_9] : memref<4x128xf32, #tpu.memory_space<vmem>>, vector<4x128xf32>
    tpu.vector_store %arg7[%c0_8, %c0_9], %14 {strides = array<i32>} : memref<4x128xf32, #tpu.memory_space<vmem>>, vector<4x128xf32>,
    %c0_i32_10 = arith.constant 0 : i32
    %16 = arith.cmpi eq, %arg2, %c0_i32_10 : i32
    %17 = arith.extui %16 : i1 to i32
    %c0_i32_11 = arith.constant 0 : i32
    %18 = arith.cmpi ne, %17, %c0_i32_11 : i32
    scf.if %18 {
      %c0_12 = arith.constant 0 : index
      %c0_13 = arith.constant 0 : index
      %19 = vector.load %arg7[%c0_12, %c0_13] : memref<4x128xf32, #tpu.memory_space<vmem>>, vector<4x128xf32>
      %c0_14 = arith.constant 0 : index
      %c0_15 = arith.constant 0 : index
      %20 = vector.load %arg5[%c0_14, %c0_15] : memref<1x128xf32, #tpu.memory_space<vmem>>, vector<1x128xf32>
      %21 = vector.broadcast %20 : vector<1x128xf32> to vector<4x128xf32>
      %22 = arith.subf %19, %21 : vector<4x128xf32>
      %c0_16 = arith.constant 0 : index
      %c0_17 = arith.constant 0 : index
      %23 = vector.load %arg6[%c0_16, %c0_17] : memref<4x128xf32, #tpu.memory_space<vmem>>, vector<4x128xf32>
      tpu.vector_store %arg6[%c0_16, %c0_17], %22 {strides = array<i32>} : memref<4x128xf32, #tpu.memory_space<vmem>>, vector<4x128xf32>,
    } else {
    }
    return
  }
  func.func @transform_0(%arg0: i32, %arg1: i32, %arg2: i32) -> (i32, i32) {
    %c0_i32 = arith.constant 0 : i32
    return %arg0, %arg2 : i32, i32
  }
  func.func @transform_1(%arg0: i32, %arg1: i32, %arg2: i32) -> (i32, i32) {
    %c0_i32 = arith.constant 0 : i32
    return %arg2, %arg1 : i32, i32
  }
  func.func @transform_2(%arg0: i32, %arg1: i32, %arg2: i32) -> (i32, i32) {
    %c0_i32 = arith.constant 0 : i32
    %c0_i32_0 = arith.constant 0 : i32
    return %c0_i32, %arg1 : i32, i32
  }
  func.func @transform_3(%arg0: i32, %arg1: i32, %arg2: i32) -> (i32, i32) {
    %c0_i32 = arith.constant 0 : i32
    return %arg0, %arg1 : i32, i32
  }
}

</mosaic_0001>

<llo_original>
// kernel: tpu_custom_call.1
$region0: #{tpu_custom_call.1}
  #allocation0 [shape = 'u32[]', space=smem, size = 0x4, offset = 0x4, fixed_abs, tag = 'smem constant byte address 0x4 - core index']
  #allocation1 [shape = 'u32[72,128]{1,0:T(1,128)}', space=vmem, size = 0x9000, scoped, tag = 'internal scratch']
  #allocation2 [shape = 'f32[4,128]{1,0:T(4,128)}', space=vmem, size = 0x800, scoped, tag = 'scratch operand']
  %s0 = inlined_call_operand.hbm [shape: f32[4,128], index: 0, kind: input, shape index: {}]
  %s1 = inlined_call_operand.hbm [shape: f32[128,128], index: 1, kind: input, shape index: {}]
  %s2 = inlined_call_operand.vmem [shape: f32[1,128], index: 2, kind: input, shape index: {}]
  %s3 = inlined_call_operand.hbm [shape: f32[4,128], index: 3, kind: output, shape index: {}]
  %s4 = sld [smem:[#allocation0]]
  $region38: #{tpu_custom_call.1} parent=0
    _
  %s6 = ssub.s32 1, %s4
  %s7 = scalar_select 0, %s6, %s4
  $region1: #{tpu_custom_call.1} parent=0
    #allocation3 [shape = 'u8[2048]{0}', space=vmem, size = 0x800, scoped, tag = 'input window, operand 0, single buffered']
    #allocation4 [shape = 's32[1]{0}', space=sflag, size = 0x4, scoped, tag = 'scoped memory for tpu_custom_call.1']
    #allocation5 [shape = 's32[1]{0}', space=sflag, size = 0x4, scoped, tag = 'scoped memory for tpu_custom_call.1']
    #allocation6 [shape = 'u8[65536]{0}', space=vmem, size = 0x10000, scoped, tag = 'input window, operand 1, single buffered']
    #allocation7 [shape = 's32[1]{0}', space=sflag, size = 0x4, scoped, tag = 'scoped memory for tpu_custom_call.1']
    #allocation8 [shape = 'u8[2048]{0}', space=vmem, size = 0x800, scoped, tag = 'output window, operand 0, single buffered']
    %8 = vsyncpa [#allocation4], 0
    %9 = vsyncpa [#allocation7], 0
    %10 = vsyncpa [#allocation5], 0
    // Predicated region
    $region2: #{tpu_custom_call.1} parent=1 // pred_check
      _
    $region3: #{tpu_custom_call.1} parent=1 // pred_check_branch
      %12 = sbr.rel (0) target = $region5
    $region4: #{tpu_custom_call.1} parent=1 // pred_region
      %14 = vsyncadd [#allocation4], 0
      %s16 = sshll.u32 %s0, 4
      %s17 = int_to_ptr.hbm [resolvable:$true] %s16
      %s18 = sshll.u32 [#allocation3], 4
      %s19 = int_to_ptr.vmem [resolvable:$true] %s18
      %21 = dma.hbm_to_vmem [thread:$0]  %s17, 64, %s19, [#allocation4]
    $region5: #{tpu_custom_call.1} parent=1 // pred_fallthru
      _
    // Predicated region
    $region6: #{tpu_custom_call.1} parent=1 // pred_check
      _
    $region7: #{tpu_custom_call.1} parent=1 // pred_check_branch
      %23 = sbr.rel (0) target = $region9
    $region8: #{tpu_custom_call.1} parent=1 // pred_region
      %25 = vsyncadd [#allocation7], 0
      %s26 = sshll.u32 %s1, 4
      %s27 = int_to_ptr.hbm [resolvable:$true] %s26
      %s28 = sshll.u32 [#allocation6], 4
      %s29 = int_to_ptr.vmem [resolvable:$true] %s28
      %34 = dma.hbm_to_vmem [thread:$0]  %s27, 2048, %s29, [#allocation7], 128, 128, 8
    $region9: #{tpu_custom_call.1} parent=1 // pred_fallthru
      _
    // Predicated region
    $region10: #{tpu_custom_call.1} parent=1 // pred_check
      _
    $region11: #{tpu_custom_call.1} parent=1 // pred_check_branch
      %36 = sbr.rel (0) target = $region13
    $region12: #{tpu_custom_call.1} parent=1 // pred_region
      _
    $region13: #{tpu_custom_call.1} parent=1 // pred_fallthru
      _
    // Predicated region
    $region14: #{tpu_custom_call.1} parent=1 // pred_check
      _
    $region15: #{tpu_custom_call.1} parent=1 // pred_check_branch
      %38 = sbr.rel (0) target = $region17
    $region16: #{tpu_custom_call.1} parent=1 // pred_region
      %40 = dma.done [#allocation4], 64
    $region17: #{tpu_custom_call.1} parent=1 // pred_fallthru
      _
    // Predicated region
    $region18: #{tpu_custom_call.1} parent=1 // pred_check
      _
    $region19: #{tpu_custom_call.1} parent=1 // pred_check_branch
      %42 = sbr.rel (0) target = $region21
    $region20: #{tpu_custom_call.1} parent=1 // pred_region
      %44 = dma.done [#allocation7], 2048
    $region21: #{tpu_custom_call.1} parent=1 // pred_fallthru
      _
    %p45 = scmp.eq.s32.totalorder 0, 0
    // Predicated region
    $region22: #{tpu_custom_call.1} parent=1 // pred_check
      %p46 = pneg %p45
    $region23: #{tpu_custom_call.1} parent=1 // pred_check_branch
      %48 = sbr.rel (%p46) target = $region25
    $region24: #{tpu_custom_call.1} parent=1 // pred_region
      %49 = vst [vmem:[#allocation2] sm:$0xf] 0.0
    $region25: #{tpu_custom_call.1} parent=1 // pred_fallthru
      _
    %v50 = vld [vmem:[#allocation3] sm:$0xf]
    %v51 = vld [vmem:[#allocation6] sm:$0xff]
    %v52 = vld [vmem:[#allocation6 + $0x8] sm:$0xff]
    %v53 = vld [vmem:[#allocation6 + $0x10] sm:$0xff]
    %v54 = vld [vmem:[#allocation6 + $0x18] sm:$0xff]
    %v55 = vld [vmem:[#allocation6 + $0x20] sm:$0xff]
    %v56 = vld [vmem:[#allocation6 + $0x28] sm:$0xff]
    %v57 = vld [vmem:[#allocation6 + $0x30] sm:$0xff]
    %v58 = vld [vmem:[#allocation6 + $0x38] sm:$0xff]
    %v59 = vld [vmem:[#allocation6 + $0x40] sm:$0xff]
    %v60 = vld [vmem:[#allocation6 + $0x48] sm:$0xff]
    %v61 = vld [vmem:[#allocation6 + $0x50] sm:$0xff]
    %v62 = vld [vmem:[#allocation6 + $0x58] sm:$0xff]
    %v63 = vld [vmem:[#allocation6 + $0x60] sm:$0xff]
    %v64 = vld [vmem:[#allocation6 + $0x68] sm:$0xff]
    %v65 = vld [vmem:[#allocation6 + $0x70] sm:$0xff]
    %v66 = vld [vmem:[#allocation6 + $0x78] sm:$0xff]
    %67 = vmatpush.msra.mxu0 %v66
    %68 = vmatpush.msra.mxu0 %v65
    %69 = vmatpush.msra.mxu0 %v64
    %70 = vmatpush.msra.mxu0 %v63
    %71 = vmatpush.msra.mxu0 %v62
    %72 = vmatpush.msra.mxu0 %v61
    %73 = vmatpush.msra.mxu0 %v60
    %74 = vmatpush.msra.mxu0 %v59
    %75 = vmatpush.msra.mxu0 %v58
    %76 = vmatpush.msra.mxu0 %v57
    %77 = vmatpush.msra.mxu0 %v56
    %78 = vmatpush.msra.mxu0 %v55
    %79 = vmatpush.msra.mxu0 %v54
    %80 = vmatpush.msra.mxu0 %v53
    %81 = vmatpush.msra.mxu0 %v52
    %82 = vmatpush.msra.mxu0 %v51
    %83 = vmatmul.f32.gmra.mxu0 %v50
    %v84 = vpop.f32.mrf.mxu0
    %v85 = vadd.f32 0.0, %v84
    %86 = vdwg.mxu0
    %v87 = vmul.f32 %v50, %v50
    %vm88 = vcmask 1043456
    %v89 = vsel %vm88, %v87, 0.0
    %90 = vadd.xlane.f32.xlu0 %v89
    %v91 = vpop.xlane.xlu0 %90
    %v92 = vmul.f32 %v91, 0.5
    %v93 = vld [vmem:[#allocation2] sm:$0xf]
    %v94 = vsub.f32 %v85, %v92
    %v95 = vadd.f32 %v93, %v94
    %96 = vst [vmem:[#allocation2] sm:$0xf] %v95
    // Predicated region
    $region26: #{tpu_custom_call.1} parent=1 // pred_check
      %p97 = pneg %p45
    $region27: #{tpu_custom_call.1} parent=1 // pred_check_branch
      %99 = sbr.rel (%p97) target = $region29
    $region28: #{tpu_custom_call.1} parent=1 // pred_region
      %v100 = vld [vmem:[#allocation2] sm:$0xf]
      %v101 = vld [vmem:[%s2] sm:$0x1]
      %v103 = vperm.slane %v101, 0
      %v105 = vsub.f32 %v100, %v103
      %106 = vst [vmem:[#allocation8] sm:$0xf] %v105
    $region29: #{tpu_custom_call.1} parent=1 // pred_fallthru
      _
    // Predicated region
    $region30: #{tpu_custom_call.1} parent=1 // pred_check
      _
    $region31: #{tpu_custom_call.1} parent=1 // pred_check_branch
      %108 = sbr.rel (0) target = $region33
    $region32: #{tpu_custom_call.1} parent=1 // pred_region
      %110 = vsyncadd [#allocation5], 0
      %s112 = sshll.u32 [#allocation8], 4
      %s113 = int_to_ptr.vmem [resolvable:$true] %s112
      %s114 = sshll.u32 %s3, 4
      %s115 = int_to_ptr.hbm [resolvable:$true] %s114
      %117 = dma.vmem_to_hbm [thread:$0]  %s113, 64, %s115, [#allocation5]
    $region33: #{tpu_custom_call.1} parent=1 // pred_fallthru
      _
    // Predicated region
    $region34: #{tpu_custom_call.1} parent=1 // pred_check
      _
    $region35: #{tpu_custom_call.1} parent=1 // pred_check_branch
      %119 = sbr.rel (0) target = $region37
    $region36: #{tpu_custom_call.1} parent=1 // pred_region
      %121 = dma.done [#allocation5], 64
    $region37: #{tpu_custom_call.1} parent=1 // pred_fallthru
      _
    %122 = vsyncpa [#allocation4], 1
    %123 = vsyncpa [#allocation7], 1
    %124 = vsyncpa [#allocation5], 1

// kernel: tpu_custom_call.1
$region0: #{tpu_custom_call.1}
  #allocation0 [shape = 'u32[]', space=smem, size = 0x4, offset = 0x4, fixed_abs, tag = 'smem constant byte address 0x4 - core index']
  #allocation1 [shape = 'u32[72,128]{1,0:T(1,128)}', space=vmem, size = 0x9000, scoped, tag = 'internal scratch']
  #allocation2 [shape = 'f32[4,128]{1,0:T(4,128)}', space=vmem, size = 0x800, scoped, tag = 'scratch operand']
  %s0 = inlined_call_operand.hbm [shape: f32[4,128], index: 0, kind: input, shape index: {}]
  %s1 = inlined_call_operand.hbm [shape: f32[128,128], index: 1, kind: input, shape index: {}]
  %s2 = inlined_call_operand.vmem [shape: f32[1,128], index: 2, kind: input, shape index: {}]
  %s3 = inlined_call_operand.hbm [shape: f32[4,128], index: 3, kind: output, shape index: {}]
  %s4 = sld [smem:[#allocation0]]
  $region38: #{tpu_custom_call.1} parent=0
    _
  %s6 = ssub.s32 1, %s4
  %s7 = scalar_select 0, %s6, %s4
  $region1: #{tpu_custom_call.1} parent=0
    #allocation3 [shape = 'u8[2048]{0}', space=vmem, size = 0x800, scoped, tag = 'input window, operand 0, single buffered']
    #allocation4 [shape = 's32[1]{0}', space=sflag, size = 0x4, scoped, tag = 'scoped memory for tpu_custom_call.1']
    #allocation5 [shape = 's32[1]{0}', space=sflag, size = 0x4, scoped, tag = 'scoped memory for tpu_custom_call.1']
    #allocation6 [shape = 'u8[65536]{0}', space=vmem, size = 0x10000, scoped, tag = 'input window, operand 1, single buffered']
    #allocation7 [shape = 's32[1]{0}', space=sflag, size = 0x4, scoped, tag = 'scoped memory for tpu_custom_call.1']
    #allocation8 [shape = 'u8[2048]{0}', space=vmem, size = 0x800, scoped, tag = 'output window, operand 0, single buffered']
    %8 = vsyncpa [#allocation4], 0
    %9 = vsyncpa [#allocation7], 0
    %10 = vsyncpa [#allocation5], 0
    // Predicated region
    $region2: #{tpu_custom_call.1} parent=1 // pred_check
      _
    $region3: #{tpu_custom_call.1} parent=1 // pred_check_branch
      %12 = sbr.rel (0) target = $region5
    $region4: #{tpu_custom_call.1} parent=1 // pred_region
      %14 = vsyncadd [#allocation4], 0
      %s16 = sshll.u32 %s0, 4
      %s17 = int_to_ptr.hbm [resolvable:$true] %s16
      %s18 = sshll.u32 [#allocation3], 4
      %s19 = int_to_ptr.vmem [resolvable:$true] %s18
      %21 = dma.hbm_to_vmem [thread:$0]  %s17, 64, %s19, [#allocation4]
    $region5: #{tpu_custom_call.1} parent=1 // pred_fallthru
      _
    // Predicated region
    $region6: #{tpu_custom_call.1} parent=1 // pred_check
      _
    $region7: #{tpu_custom_call.1} parent=1 // pred_check_branch
      %23 = sbr.rel (0) target = $region9
    $region8: #{tpu_custom_call.1} parent=1 // pred_region
      %25 = vsyncadd [#allocation7], 0
      %s26 = sshll.u32 %s1, 4
      %s27 = int_to_ptr.hbm [resolvable:$true] %s26
      %s28 = sshll.u32 [#allocation6], 4
      %s29 = int_to_ptr.vmem [resolvable:$true] %s28
      %34 = dma.hbm_to_vmem [thread:$0]  %s27, 2048, %s29, [#allocation7], 128, 128, 8
    $region9: #{tpu_custom_call.1} parent=1 // pred_fallthru
      _
    // Predicated region
    $region10: #{tpu_custom_call.1} parent=1 // pred_check
      _
    $region11: #{tpu_custom_call.1} parent=1 // pred_check_branch
      %36 = sbr.rel (0) target = $region13
    $region12: #{tpu_custom_call.1} parent=1 // pred_region
      _
    $region13: #{tpu_custom_call.1} parent=1 // pred_fallthru
      _
    // Predicated region
    $region14: #{tpu_custom_call.1} parent=1 // pred_check
      _
    $region15: #{tpu_custom_call.1} parent=1 // pred_check_branch
      %38 = sbr.rel (0) target = $region17
    $region16: #{tpu_custom_call.1} parent=1 // pred_region
      %40 = dma.done [#allocation4], 64
    $region17: #{tpu_custom_call.1} parent=1 // pred_fallthru
      _
    // Predicated region
    $region18: #{tpu_custom_call.1} parent=1 // pred_check
      _
    $region19: #{tpu_custom_call.1} parent=1 // pred_check_branch
      %42 = sbr.rel (0) target = $region21
    $region20: #{tpu_custom_call.1} parent=1 // pred_region
      %44 = dma.done [#allocation7], 2048
    $region21: #{tpu_custom_call.1} parent=1 // pred_fallthru
      _
    %p45 = scmp.eq.s32.totalorder 0, 0
    // Predicated region
    $region22: #{tpu_custom_call.1} parent=1 // pred_check
      %p46 = pneg %p45
    $region23: #{tpu_custom_call.1} parent=1 // pred_check_branch
      %48 = sbr.rel (%p46) target = $region25
    $region24: #{tpu_custom_call.1} parent=1 // pred_region
      %49 = vst [vmem:[#allocation2] sm:$0xf] 0.0
    $region25: #{tpu_custom_call.1} parent=1 // pred_fallthru
      _
    %v50 = vld [vmem:[#allocation3] sm:$0xf]
    %v51 = vld [vmem:[#allocation6] sm:$0xff]
    %v52 = vld [vmem:[#allocation6 + $0x8] sm:$0xff]
    %v53 = vld [vmem:[#allocation6 + $0x10] sm:$0xff]
    %v54 = vld [vmem:[#allocation6 + $0x18] sm:$0xff]
    %v55 = vld [vmem:[#allocation6 + $0x20] sm:$0xff]
    %v56 = vld [vmem:[#allocation6 + $0x28] sm:$0xff]
    %v57 = vld [vmem:[#allocation6 + $0x30] sm:$0xff]
    %v58 = vld [vmem:[#allocation6 + $0x38] sm:$0xff]
    %v59 = vld [vmem:[#allocation6 + $0x40] sm:$0xff]
    %v60 = vld [vmem:[#allocation6 + $0x48] sm:$0xff]
    %v61 = vld [vmem:[#allocation6 + $0x50] sm:$0xff]
    %v62 = vld [vmem:[#allocation6 + $0x58] sm:$0xff]
    %v63 = vld [vmem:[#allocation6 + $0x60] sm:$0xff]
    %v64 = vld [vmem:[#allocation6 + $0x68] sm:$0xff]
    %v65 = vld [vmem:[#allocation6 + $0x70] sm:$0xff]
    %v66 = vld [vmem:[#allocation6 + $0x78] sm:$0xff]
    %67 = vmatpush.msra.mxu0 %v66
    %68 = vmatpush.msra.mxu0 %v65
    %69 = vmatpush.msra.mxu0 %v64
    %70 = vmatpush.msra.mxu0 %v63
    %71 = vmatpush.msra.mxu0 %v62
    %72 = vmatpush.msra.mxu0 %v61
    %73 = vmatpush.msra.mxu0 %v60
    %74 = vmatpush.msra.mxu0 %v59
    %75 = vmatpush.msra.mxu0 %v58
    %76 = vmatpush.msra.mxu0 %v57
    %77 = vmatpush.msra.mxu0 %v56
    %78 = vmatpush.msra.mxu0 %v55
    %79 = vmatpush.msra.mxu0 %v54
    %80 = vmatpush.msra.mxu0 %v53
    %81 = vmatpush.msra.mxu0 %v52
    %82 = vmatpush.msra.mxu0 %v51
    %83 = vmatmul.f32.gmra.mxu0 %v50
    %v84 = vpop.f32.mrf.mxu0
    %v85 = vadd.f32 0.0, %v84
    %86 = vdwg.mxu0
    %v87 = vmul.f32 %v50, %v50
    %vm88 = vcmask 1043456
    %v89 = vsel %vm88, %v87, 0.0
    %90 = vadd.xlane.f32.xlu0 %v89
    %v91 = vpop.xlane.xlu0 %90
    %v92 = vmul.f32 %v91, 0.5
    %v93 = vld [vmem:[#allocation2] sm:$0xf]
    %v94 = vsub.f32 %v85, %v92
    %v95 = vadd.f32 %v93, %v94
    %96 = vst [vmem:[#allocation2] sm:$0xf] %v95
    // Predicated region
    $region26: #{tpu_custom_call.1} parent=1 // pred_check
      %p97 = pneg %p45
    $region27: #{tpu_custom_call.1} parent=1 // pred_check_branch
      %99 = sbr.rel (%p97) target = $region29
    $region28: #{tpu_custom_call.1} parent=1 // pred_region
      %v100 = vld [vmem:[#allocation2] sm:$0xf]
      %v101 = vld [vmem:[%s2] sm:$0x1]
      %v103 = vperm.slane %v101, 0
      %v105 = vsub.f32 %v100, %v103
      %106 = vst [vmem:[#allocation8] sm:$0xf] %v105
    $region29: #{tpu_custom_call.1} parent=1 // pred_fallthru
      _
    // Predicated region
    $region30: #{tpu_custom_call.1} parent=1 // pred_check
      _
    $region31: #{tpu_custom_call.1} parent=1 // pred_check_branch
      %108 = sbr.rel (0) target = $region33
    $region32: #{tpu_custom_call.1} parent=1 // pred_region
      %110 = vsyncadd [#allocation5], 0
      %s112 = sshll.u32 [#allocation8], 4
      %s113 = int_to_ptr.vmem [resolvable:$true] %s112
      %s114 = sshll.u32 %s3, 4
      %s115 = int_to_ptr.hbm [resolvable:$true] %s114
      %117 = dma.vmem_to_hbm [thread:$0]  %s113, 64, %s115, [#allocation5]
    $region33: #{tpu_custom_call.1} parent=1 // pred_fallthru
      _
    // Predicated region
    $region34: #{tpu_custom_call.1} parent=1 // pred_check
      _
    $region35: #{tpu_custom_call.1} parent=1 // pred_check_branch
      %119 = sbr.rel (0) target = $region37
    $region36: #{tpu_custom_call.1} parent=1 // pred_region
      %121 = dma.done [#allocation5], 64
    $region37: #{tpu_custom_call.1} parent=1 // pred_fallthru
      _
    %122 = vsyncpa [#allocation4], 1
    %123 = vsyncpa [#allocation7], 1
    %124 = vsyncpa [#allocation5], 1

</llo_original>
